<compile_context>
chip_gen: v7x
topology: tpu7x:2x2x1
jax: 0.10.0
libtpu: 0.0.40
codegen_flags: <defaults>
</compile_context>

<pallas_src>
import functools

import jax
import jax.numpy as jnp
from jax.experimental import pallas as pl
from jax.experimental.pallas import tpu as pltpu


_W1_RESIDENT_BYTES = 20 * 1024 * 1024   # keep bf16 W1 fully VMEM-resident below this
_VMEM_BUDGET = 40 * 1024 * 1024         # tile-picking budget (leave headroom vs. the limit)
_VMEM_LIMIT = 48 * 1024 * 1024          # scoped VMEM limit handed to Mosaic (<= v7x physical)


def _su(n):   # sublane-padded rows (8)
    return max(8, -(-n // 8) * 8)


def _la(n):   # lane-padded cols (128)
    return max(128, -(-n // 128) * 128)


def _vmem_bytes(tb, tf, f, hd, n_x, w1_resident):
    x_tiles = n_x * 2 * _su(tb) * _la(tf) * 4           # double-buffered f32 x tiles
    alpha = 2 * _su(tb) * 128 * 4
    w1 = _su(f) * _la(hd) * 2 if w1_resident else 2 * _su(tf) * _la(hd) * 2
    gram = _su(hd) * _la(hd) * 4                        # Buffered(1): single copy
    h_acc = _su(tb) * _la(hd) * 4
    out = 2 * _su(tb) * 128 * 4
    return x_tiles + alpha + w1 + gram + h_acc + out


def _pick_tb(b, *, prefer_many):
    """Batch tile: multiple of 8 (or the full batch when b % 8 != 0)."""
    if b % 8 != 0:
        return b                                   # full-extent block is always legal
    if prefer_many:
        # >=2 blocks on the "parallel" axis when possible (v7x dual-TensorCore).
        cap = min(256, b // 2) if b >= 16 else b
        for c in (256, 128, 64, 32, 16, 8):
            if c <= cap and b % c == 0:
                return c
        return b
    # W1 is re-streamed once per batch tile in this regime -> keep the tile count <= 2.
    half = b // 2
    if b >= 16 and half % 8 == 0:
        return half
    return b


def _pick_tf(f, tb, hd, n_x, w1_resident):
    """F tile: largest multiple-of-128 divisor that fits the VMEM budget."""
    if f % 128 != 0:
        # TODO(synk): very large, non-128-aligned F would need an Element/BoundedSlice
        # scheme; full-extent blocks are used here (fine for typical image shapes).
        return f
    for tf in (2048, 1024, 512, 256, 128):
        if f % tf == 0 and _vmem_bytes(tb, tf, f, hd, n_x, w1_resident) <= _VMEM_BUDGET:
            return tf
    return 128


def _make_kernel(mode, w1_resident, tf):
    """Penalty kernel specialized on the (static) mode and W1 residency."""
    linear = mode == "linear"

    def kernel(*refs):
        if linear:
            alpha_ref, xt_ref, xg_ref, w1_ref, gram_ref, out_ref, h_acc = refs
        else:
            x_ref, w1_ref, gram_ref, out_ref, h_acc = refs

        k = pl.program_id(1)                         # F (reduction) axis, innermost

        @pl.when(k == 0)
        def _init():
            h_acc[...] = jnp.zeros_like(h_acc)

        # x_penalty for this (batch, F) tile. Inputs stream as f32 straight from HBM;
        # interpolation stays in f32 (portable incl. v5e), single cast to bf16 for the MXU.
        if linear:
            alpha = alpha_ref[...]                                       # [tb, 1]
            x_pen_f32 = xg_ref[...] + alpha * (xt_ref[...] - xg_ref[...])
        else:
            x_pen_f32 = x_ref[...]                                       # gen: x_gen, data: x_true
        x_pen = x_pen_f32.astype(jnp.bfloat16)

        if w1_resident:
            # W1 lives fully in VMEM (loaded once); take this F-tile's rows.
            w1_blk = w1_ref[pl.ds(pl.multiple_of(k * tf, tf), tf), :]
        else:
            w1_blk = w1_ref[...]

        # h = x_pen @ W1 accumulated across F tiles (bf16 MXU, f32 accumulation).
        h_acc[...] += jnp.dot(x_pen, w1_blk, preferred_element_type=jnp.float32)

        @pl.when(k == pl.num_programs(1) - 1)
        def _finalize():
            t = jnp.tanh(h_acc[...])                                     # [tb, hd]
            u = 1.0 - t * t
            # Gram identity with w2 pre-folded: ||g_b||^2 = u_b @ gram_w @ u_b^T.
            v = jnp.dot(u, gram_ref[...], preferred_element_type=jnp.float32)
            sq = jnp.maximum(jnp.sum(v * u, axis=-1, keepdims=True), 0.0)
            out_ref[...] = (jnp.sqrt(sq) - 1.0) ** 2                     # [tb, 1]

    return kernel


@functools.partial(jax.jit, static_argnames=("mode",))
def get_penalty(x_true, x_gen, w1, w2, alpha_key, mode="linear"):
    """JAX/Pallas wrapper mirroring Discriminator.get_penalty (mode: linear/gen/data)."""
    if mode not in ("linear", "gen", "data"):
        raise ValueError(mode)

    b = x_gen.shape[0]
    xg = x_gen.reshape(b, -1).astype(jnp.float32)
    xt = x_true.reshape(x_gen.shape).reshape(b, -1).astype(jnp.float32)   # view_as(x_gen)
    f = xg.shape[1]
    hd = w1.shape[1]

    # One-time weight prep (small next to the [B, F] stream). bf16 W1 matches the
    # kernel's MXU quantization exactly; the Gram matrix is a single-pass bf16 MXU
    # matmul with f32 accumulation, and w2 is folded in so the kernel epilogue needs
    # no separate w2 multiply.
    # TODO(synk): when hd >> b the F*hd^2 Gram precompute exceeds the B*F*hd matmul it
    # replaces; a two-pass (dt @ W1^T) kernel would win in that regime.
    w1_bf = w1.astype(jnp.bfloat16)
    w2f = w2.reshape(-1).astype(jnp.float32)
    gram = jnp.dot(w1_bf.T, w1_bf, preferred_element_type=jnp.float32)    # [hd, hd]
    gram_w = (w2f[:, None] * gram) * w2f[None, :]

    w1_resident = f * hd * 2 <= _W1_RESIDENT_BYTES
    n_x = 2 if mode == "linear" else 1
    tb = _pick_tb(b, prefer_many=w1_resident)
    tf = _pick_tf(f, tb, hd, n_x, w1_resident)
    n_b, n_k = b // tb, f // tf
    grid = (n_b, n_k)                                # batch outer ("parallel"), F inner ("arbitrary")

    x_spec = pl.BlockSpec((tb, tf), lambda i, k: (i, k))
    if w1_resident:
        w1_spec = pl.BlockSpec((f, hd), lambda i, k: (0, 0), pipeline_mode=pl.Buffered(1))
    else:
        w1_spec = pl.BlockSpec((tf, hd), lambda i, k: (k, 0))
    gram_spec = pl.BlockSpec((hd, hd), lambda i, k: (0, 0), pipeline_mode=pl.Buffered(1))
    out_spec = pl.BlockSpec((tb, 1), lambda i, k: (i, 0))

    if mode == "linear":
        alpha = jax.random.uniform(alpha_key, (b, 1), dtype=jnp.float32)
        in_specs = [pl.BlockSpec((tb, 1), lambda i, k: (i, 0)), x_spec, x_spec, w1_spec, gram_spec]
        args = (alpha, xt, xg, w1_bf, gram_w)
    else:
        x_only = xg if mode == "gen" else xt
        in_specs = [x_spec, w1_spec, gram_spec]
        args = (x_only, w1_bf, gram_w)

    per_sample = pl.pallas_call(
        _make_kernel(mode, w1_resident, tf),
        out_shape=jax.ShapeDtypeStruct((b, 1), jnp.float32),
        grid_spec=pltpu.PrefetchScalarGridSpec(
            num_scalar_prefetch=0,
            grid=grid,
            in_specs=in_specs,
            out_specs=out_spec,
            scratch_shapes=[pltpu.VMEM((tb, hd), jnp.float32)],
        ),
        compiler_params=pltpu.CompilerParams(
            dimension_semantics=("parallel", "arbitrary"),
            vmem_limit_bytes=_VMEM_LIMIT,
        ),
    )(*args)

    # Mean over the batch in XLA (every row is a real sample — no padding rows exist).
    return jnp.mean(per_sample)


def _reference_penalty(x_true, x_gen, w1, w2, alpha):
    """Pure-JAX autograd reference mirroring the kernel's bf16 quantization points."""
    b = x_gen.shape[0]
    q = lambda a: a.astype(jnp.bfloat16).astype(jnp.float32)
    xt = x_true.reshape(x_gen.shape).reshape(b, -1).astype(jnp.float32)
    xg = x_gen.reshape(b, -1).astype(jnp.float32)
    w1q = q(w1)
    x_pen = q(xg + alpha * (xt - xg))                 # f32 interpolation, bf16-quantized (as in-kernel)

    def score(x):
        h = jnp.dot(x, w1q, precision=jax.lax.Precision.HIGHEST)
        return jnp.sum(jnp.tanh(h) * w2.reshape(1, -1), axis=-1)

    g = jax.grad(lambda x: jnp.sum(score(x)))(x_pen)
    norms = jnp.sqrt(jnp.sum(g * g, axis=1))
    return jnp.mean((norms - 1.0) ** 2)


if __name__ == "__main__":
    # TODO(synk): Discriminator.forward() is abstract in the reference module; a concrete
    # tanh-MLP head D(x) = tanh(flatten(x) @ W1) @ w2 is supplied so the gradient-penalty
    # hot path is fully computable (its gradient is analytic).
    key = jax.random.PRNGKey(0)
    k_xt, k_xg, k_w1, k_w2, k_alpha = jax.random.split(key, 5)

    B, C, H, W = 2, 4, 16, 16
    F = C * H * W
    HIDDEN = 32

    x_true = jax.random.normal(k_xt, (B, C, H, W), dtype=jnp.float32)
    x_gen = jax.random.normal(k_xg, (B, C, H, W), dtype=jnp.float32)
    w1 = jax.random.normal(k_w1, (F, HIDDEN), dtype=jnp.float32) * 0.05
    w2 = jax.random.normal(k_w2, (HIDDEN,), dtype=jnp.float32) * 0.5

    # linear mode (default GP path) vs. autograd reference (same alpha draw).
    pen = jax.block_until_ready(get_penalty(x_true, x_gen, w1, w2, k_alpha, mode="linear"))
    alpha = jax.random.uniform(k_alpha, (B, 1), dtype=jnp.float32)
    ref = _reference_penalty(x_true, x_gen, w1, w2, alpha)
    assert jnp.allclose(pen, ref, rtol=5e-3, atol=1e-4), ("linear", pen, ref)

    # gen / data modes exercise the specialized single-input kernels.
    pen_gen = jax.block_until_ready(get_penalty(x_true, x_gen, w1, w2, k_alpha, mode="gen"))
    ref_gen = _reference_penalty(x_true, x_gen, w1, w2, jnp.zeros((B, 1), jnp.float32))
    assert jnp.allclose(pen_gen, ref_gen, rtol=5e-3, atol=1e-4), ("gen", pen_gen, ref_gen)

    pen_data = jax.block_until_ready(get_penalty(x_true, x_gen, w1, w2, k_alpha, mode="data"))
    ref_data = _reference_penalty(x_true, x_gen, w1, w2, jnp.ones((B, 1), jnp.float32))
    assert jnp.allclose(pen_data, ref_data, rtol=5e-3, atol=1e-4), ("data", pen_data, ref_data)

    # Multi-tile check: grid > (1, 1) exercises the k==0 init / last-k finalize path,
    # multiple batch tiles on the "parallel" axis, and the resident-W1 dynamic F slice.
    key2 = jax.random.PRNGKey(1)
    k2_xt, k2_xg, k2_w1, k2_w2, k2_a = jax.random.split(key2, 5)
    B2, C2, H2, W2, HIDDEN2 = 16, 4, 32, 32, 64
    F2 = C2 * H2 * W2
    x_true2 = jax.random.normal(k2_xt, (B2, C2, H2, W2), dtype=jnp.float32)
    x_gen2 = jax.random.normal(k2_xg, (B2, C2, H2, W2), dtype=jnp.float32)
    w1_2 = jax.random.normal(k2_w1, (F2, HIDDEN2), dtype=jnp.float32) * 0.02
    w2_2 = jax.random.normal(k2_w2, (HIDDEN2,), dtype=jnp.float32) * 0.5

    pen2 = jax.block_until_ready(get_penalty(x_true2, x_gen2, w1_2, w2_2, k2_a, mode="linear"))
    alpha2 = jax.random.uniform(k2_a, (B2, 1), dtype=jnp.float32)
    ref2 = _reference_penalty(x_true2, x_gen2, w1_2, w2_2, alpha2)
    assert jnp.allclose(pen2, ref2, rtol=5e-3, atol=1e-4), ("multi-tile", pen2, ref2)

    print("KERNEL_OK")
</pallas_src>

<mosaic_0001>
module attributes {stable_mosaic.version = 11 : i64} {
  func.func @kernel(%arg0: i32, %arg1: i32, %arg2: memref<2x1xf32, #tpu.memory_space<vmem>>, %arg3: memref<2x1024xf32, #tpu.memory_space<vmem>>, %arg4: memref<2x1024xf32, #tpu.memory_space<vmem>>, %arg5: memref<1024x32xbf16, #tpu.memory_space<vmem>>, %arg6: memref<32x32xf32, #tpu.memory_space<vmem>>, %arg7: memref<2x1xf32, #tpu.memory_space<vmem>>, %arg8: memref<2x32xf32, #tpu.memory_space<vmem>>) attributes {dimension_semantics = [#tpu.dimension_semantics<parallel>, #tpu.dimension_semantics<arbitrary>], iteration_bounds = array<i64: 1, 1>, scalar_prefetch = 0 : i64, scratch_operands = 1 : i64, tpu.core_type = #tpu.core_type<tc>, window_params = [{transform_indices = @transform_0, window_bounds = array<i64: 2, 1>}, {transform_indices = @transform_1, window_bounds = array<i64: 2, 1024>}, {transform_indices = @transform_2, window_bounds = array<i64: 2, 1024>}, {pipeline_mode = #tpu.pipeline_mode<synchronous>, transform_indices = @transform_3, window_bounds = array<i64: 1024, 32>}, {pipeline_mode = #tpu.pipeline_mode<synchronous>, transform_indices = @transform_4, window_bounds = array<i64: 32, 32>}, {transform_indices = @transform_5, window_bounds = array<i64: 2, 1>}]} {
    %c0_i32 = arith.constant 0 : i32
    %0 = arith.cmpi eq, %arg1, %c0_i32 : i32
    %1 = arith.extui %0 : i1 to i32
    %c0_i32_0 = arith.constant 0 : i32
    %2 = arith.cmpi ne, %1, %c0_i32_0 : i32
    scf.if %2 {
      %cst_15 = arith.constant 0.000000e+00 : f32
      %23 = vector.broadcast %cst_15 : f32 to vector<2x32xf32>
      %c0_16 = arith.constant 0 : index
      %c0_17 = arith.constant 0 : index
      %24 = vector.load %arg8[%c0_16, %c0_17] : memref<2x32xf32, #tpu.memory_space<vmem>>, vector<2x32xf32>
      tpu.vector_store %arg8[%c0_16, %c0_17], %23 {strides = array<i32>} : memref<2x32xf32, #tpu.memory_space<vmem>>, vector<2x32xf32>,
    } else {
    }
    %c0 = arith.constant 0 : index
    %c0_1 = arith.constant 0 : index
    %3 = vector.load %arg2[%c0, %c0_1] : memref<2x1xf32, #tpu.memory_space<vmem>>, vector<2x1xf32>
    %c0_2 = arith.constant 0 : index
    %c0_3 = arith.constant 0 : index
    %4 = vector.load %arg4[%c0_2, %c0_3] : memref<2x1024xf32, #tpu.memory_space<vmem>>, vector<2x1024xf32>
    %c0_4 = arith.constant 0 : index
    %c0_5 = arith.constant 0 : index
    %5 = vector.load %arg3[%c0_4, %c0_5] : memref<2x1024xf32, #tpu.memory_space<vmem>>, vector<2x1024xf32>
    %c0_6 = arith.constant 0 : index
    %c0_7 = arith.constant 0 : index
    %6 = vector.load %arg4[%c0_6, %c0_7] : memref<2x1024xf32, #tpu.memory_space<vmem>>, vector<2x1024xf32>
    %7 = arith.subf %5, %6 : vector<2x1024xf32>
    %8 = vector.broadcast %3 : vector<2x1xf32> to vector<2x1024xf32>
    %9 = arith.mulf %8, %7 : vector<2x1024xf32>
    %10 = arith.addf %4, %9 : vector<2x1024xf32>
    %11 = arith.truncf %10 : vector<2x1024xf32> to vector<2x1024xbf16>
    %c1024_i32 = arith.constant 1024 : i32
    %12 = arith.muli %arg1, %c1024_i32 : i32
    %13 = tpu.assume_multiple %12, 1024 : i32
    %14 = arith.index_cast %13 : i32 to index
    %c0_8 = arith.constant 0 : index
    %15 = vector.load %arg5[%14, %c0_8] : memref<1024x32xbf16, #tpu.memory_space<vmem>>, vector<1024x32xbf16>
    %c0_9 = arith.constant 0 : index
    %c0_10 = arith.constant 0 : index
    %16 = vector.load %arg8[%c0_9, %c0_10] : memref<2x32xf32, #tpu.memory_space<vmem>>, vector<2x32xf32>
    %cst = arith.constant dense<0.000000e+00> : vector<2x32xf32>
    %17 = tpu.matmul %11, %15, %cst {dimension_numbers = #tpu.dot_dimension_numbers<[1], [0], [0], [1], [0, 0, 1, 1], [], []>} : vector<2x1024xbf16>, vector<1024x32xbf16>, vector<2x32xf32> -> vector<2x32xf32>
    %18 = arith.addf %16, %17 : vector<2x32xf32>
    %c0_11 = arith.constant 0 : index
    %c0_12 = arith.constant 0 : index
    %19 = vector.load %arg8[%c0_11, %c0_12] : memref<2x32xf32, #tpu.memory_space<vmem>>, vector<2x32xf32>
    tpu.vector_store %arg8[%c0_11, %c0_12], %18 {strides = array<i32>} : memref<2x32xf32, #tpu.memory_space<vmem>>, vector<2x32xf32>,
    %c0_i32_13 = arith.constant 0 : i32
    %20 = arith.cmpi eq, %arg1, %c0_i32_13 : i32
    %21 = arith.extui %20 : i1 to i32
    %c0_i32_14 = arith.constant 0 : i32
    %22 = arith.cmpi ne, %21, %c0_i32_14 : i32
    scf.if %22 {
      %c0_15 = arith.constant 0 : index
      %c0_16 = arith.constant 0 : index
      %23 = vector.load %arg8[%c0_15, %c0_16] : memref<2x32xf32, #tpu.memory_space<vmem>>, vector<2x32xf32>
      %24 = math.tanh %23 : vector<2x32xf32>
      %25 = arith.mulf %24, %24 : vector<2x32xf32>
      %cst_17 = arith.constant 1.000000e+00 : f32
      %26 = vector.broadcast %cst_17 : f32 to vector<2x32xf32>
      %27 = arith.subf %26, %25 : vector<2x32xf32>
      %c0_18 = arith.constant 0 : index
      %c0_19 = arith.constant 0 : index
      %28 = vector.load %arg6[%c0_18, %c0_19] : memref<32x32xf32, #tpu.memory_space<vmem>>, vector<32x32xf32>
      %cst_20 = arith.constant dense<0.000000e+00> : vector<2x32xf32>
      %29 = tpu.matmul %27, %28, %cst_20 {dimension_numbers = #tpu.dot_dimension_numbers<[1], [0], [0], [1], [0, 0, 1, 1], [], []>} : vector<2x32xf32>, vector<32x32xf32>, vector<2x32xf32> -> vector<2x32xf32>
      %30 = arith.mulf %29, %27 : vector<2x32xf32>
      %cst_21 = arith.constant dense<0.000000e+00> : vector<2xf32>
      %31 = vector.multi_reduction <add>, %30, %cst_21 [1] : vector<2x32xf32> to vector<2xf32>
      %32 = vector.shape_cast %31 : vector<2xf32> to vector<2x1xf32>
      %cst_22 = arith.constant 0.000000e+00 : f32
      %33 = vector.broadcast %cst_22 : f32 to vector<2x1xf32>
      %34 = arith.maximumf %32, %33 : vector<2x1xf32>
      %35 = math.sqrt %34 : vector<2x1xf32>
      %cst_23 = arith.constant 1.000000e+00 : f32
      %36 = vector.broadcast %cst_23 : f32 to vector<2x1xf32>
      %37 = arith.subf %35, %36 : vector<2x1xf32>
      %38 = arith.mulf %37, %37 : vector<2x1xf32>
      %c0_24 = arith.constant 0 : index
      %c0_25 = arith.constant 0 : index
      %39 = vector.load %arg7[%c0_24, %c0_25] : memref<2x1xf32, #tpu.memory_space<vmem>>, vector<2x1xf32>
      tpu.vector_store %arg7[%c0_24, %c0_25], %38 {strides = array<i32>} : memref<2x1xf32, #tpu.memory_space<vmem>>, vector<2x1xf32>,
    } else {
    }
    return
  }
  func.func @transform_0(%arg0: i32, %arg1: i32) -> (i32, i32) {
    %c0_i32 = arith.constant 0 : i32
    %c0_i32_0 = arith.constant 0 : i32
    return %arg0, %c0_i32 : i32, i32
  }
  func.func @transform_1(%arg0: i32, %arg1: i32) -> (i32, i32) {
    %c0_i32 = arith.constant 0 : i32
    return %arg0, %arg1 : i32, i32
  }
  func.func @transform_2(%arg0: i32, %arg1: i32) -> (i32, i32) {
    %c0_i32 = arith.constant 0 : i32
    return %arg0, %arg1 : i32, i32
  }
  func.func @transform_3(%arg0: i32, %arg1: i32) -> (i32, i32) {
    %c0_i32 = arith.constant 0 : i32
    %c0_i32_0 = arith.constant 0 : i32
    %c0_i32_1 = arith.constant 0 : i32
    return %c0_i32, %c0_i32_0 : i32, i32
  }
  func.func @transform_4(%arg0: i32, %arg1: i32) -> (i32, i32) {
    %c0_i32 = arith.constant 0 : i32
    %c0_i32_0 = arith.constant 0 : i32
    %c0_i32_1 = arith.constant 0 : i32
    return %c0_i32, %c0_i32_0 : i32, i32
  }
  func.func @transform_5(%arg0: i32, %arg1: i32) -> (i32, i32) {
    %c0_i32 = arith.constant 0 : i32
    %c0_i32_0 = arith.constant 0 : i32
    return %arg0, %c0_i32 : i32, i32
  }
}

</mosaic_0001>

<llo_original>
// kernel: get_penalty.1
$region0: #{get_penalty.1}
  #allocation0 [shape = 'u32[]', space=smem, size = 0x4, offset = 0x4, fixed_abs, tag = 'smem constant byte address 0x4 - core index']
  #allocation1 [shape = 'u32[144,128]{1,0:T(1,128)}', space=vmem, size = 0x12000, scoped, tag = 'internal scratch']
  #allocation2 [shape = 'f32[2,32]{1,0:T(2,128)}', space=vmem, size = 0x400, scoped, tag = 'scratch operand']
  %s0 = inlined_call_operand.vmem [shape: f32[2,1], index: 0, kind: input, shape index: {}]
  %s1 = inlined_call_operand.vmem [shape: f32[2,1024], index: 1, kind: input, shape index: {}]
  %s2 = inlined_call_operand.vmem [shape: f32[2,1024], index: 2, kind: input, shape index: {}]
  %s3 = inlined_call_operand.vmem [shape: bf16[1024,32], index: 3, kind: input, shape index: {}]
  %s4 = inlined_call_operand.vmem [shape: f32[32,32], index: 4, kind: input, shape index: {}]
  %s5 = inlined_call_operand.vmem [shape: f32[2,1], index: 5, kind: output, shape index: {}]
  %s6 = sld [smem:[#allocation0]]
  $region38: #{get_penalty.1} parent=0
    _
  %s8 = ssub.s32 1, %s6
  %s9 = scalar_select 0, %s8, %s6
  // Predicated region
  $region2: #{get_penalty.1} parent=0 // pred_check
    _
  $region3: #{get_penalty.1} parent=0 // pred_check_branch
    %11 = sbr.rel (0) target = $region5
  $region4: #{get_penalty.1} parent=0 // pred_region
    _
  $region5: #{get_penalty.1} parent=0 // pred_fallthru
    _
  // Predicated region
  $region6: #{get_penalty.1} parent=0 // pred_check
    _
  $region7: #{get_penalty.1} parent=0 // pred_check_branch
    %13 = sbr.rel (0) target = $region9
  $region8: #{get_penalty.1} parent=0 // pred_region
    _
  $region9: #{get_penalty.1} parent=0 // pred_fallthru
    _
  // Predicated region
  $region10: #{get_penalty.1} parent=0 // pred_check
    _
  $region11: #{get_penalty.1} parent=0 // pred_check_branch
    %15 = sbr.rel (0) target = $region13
  $region12: #{get_penalty.1} parent=0 // pred_region
    _
  $region13: #{get_penalty.1} parent=0 // pred_fallthru
    _
  // Predicated region
  $region14: #{get_penalty.1} parent=0 // pred_check
    _
  $region15: #{get_penalty.1} parent=0 // pred_check_branch
    %17 = sbr.rel (0) target = $region17
  $region16: #{get_penalty.1} parent=0 // pred_region
    _
  $region17: #{get_penalty.1} parent=0 // pred_fallthru
    _
  // Predicated region
  $region18: #{get_penalty.1} parent=0 // pred_check
    _
  $region19: #{get_penalty.1} parent=0 // pred_check_branch
    %19 = sbr.rel (0) target = $region21
  $region20: #{get_penalty.1} parent=0 // pred_region
    _
  $region21: #{get_penalty.1} parent=0 // pred_fallthru
    _
  %p21 = scmp.eq.s32.totalorder 0, 0
  // Predicated region
  $region22: #{get_penalty.1} parent=0 // pred_check
    %p22 = pneg %p21
  $region23: #{get_penalty.1} parent=0 // pred_check_branch
    %24 = sbr.rel (%p22) target = $region25
  $region24: #{get_penalty.1} parent=0 // pred_region
    %vm25 = vcmask 254976
    %26 = vst.msk [vmem:[#allocation2] sm:$0x3] %vm25, 0.0
  $region25: #{get_penalty.1} parent=0 // pred_fallthru
    _
  %v27 = vld [vmem:[%s0] sm:$0x3]
  %v28 = vld [vmem:[%s2] sm:$0xff]
  %v29 = vld [vmem:[%s2 + $0x8] sm:$0xff]
  %v30 = vld [vmem:[%s1] sm:$0xff]
  %v31 = vld [vmem:[%s1 + $0x8] sm:$0xff]
  %v32 = vsub.f32 %v30, %v28
  %v33 = vsub.f32 %v31, %v29
  %35 = vset.pattern.permute.xlu0 0
  %36 = vperm.xlu0 %35, %v27
  %v37 = vpop.permute.xlu0 %36
  %v41 = vcombine.high %v32, %v32
  %v43 = vunpack.c.l.s4 1983009808
  %v44 = vunpack.c.0.s8 %v43
  %v45 = vlaneseq
  %v46 = vshrl.u32 %v45, 7
  %v47 = vsub.s32 %v44, %v46
  %v48 = vrot.slane %v32, %v47
  %v50 = vunpack.c.l.s4 1983009808
  %v51 = vunpack.c.0.s8 %v50
  %v52 = vlaneseq
  %v53 = vshrl.u32 %v52, 7
  %v54 = vsub.s32 %v51, %v53
  %v55 = vrot.slane %v41, %v54
  %v56 = vcombine.high %v48, %v48
  %v57 = vcombine.high %v55, %v55
  %v58 = vcombine.high %v33, %v33
  %v60 = vunpack.c.l.s4 1983009808
  %v61 = vunpack.c.0.s8 %v60
  %v62 = vlaneseq
  %v63 = vshrl.u32 %v62, 7
  %v64 = vsub.s32 %v61, %v63
  %v65 = vrot.slane %v33, %v64
  %v67 = vunpack.c.l.s4 1983009808
  %v68 = vunpack.c.0.s8 %v67
  %v69 = vlaneseq
  %v70 = vshrl.u32 %v69, 7
  %v71 = vsub.s32 %v68, %v70
  %v72 = vrot.slane %v58, %v71
  %v73 = vcombine.high %v65, %v65
  %v74 = vcombine.high %v72, %v72
  %v83 = vmul.f32 %v37, %v48
  %v84 = vmul.f32 %v37, %v56
  %v85 = vmul.f32 %v37, %v55
  %v86 = vmul.f32 %v37, %v57
  %v87 = vmul.f32 %v37, %v65
  %v88 = vmul.f32 %v37, %v73
  %v89 = vmul.f32 %v37, %v72
  %v90 = vmul.f32 %v37, %v74
  %v99 = vcombine.low %v83, %v84
  %v100 = vcombine.low %v85, %v86
  %v102 = vunpack.c.l.s4 1983009808
  %v103 = vunpack.c.0.s8 %v102
  %v104 = vlaneseq
  %v105 = vshrl.u32 %v104, 7
  %v106 = vsub.s32 %v103, %v105
  %v107 = vrot.slane %v99, %v106
  %v109 = vunpack.c.l.s4 1983009808
  %v110 = vunpack.c.0.s8 %v109
  %v111 = vlaneseq
  %v112 = vshrl.u32 %v111, 7
  %v113 = vsub.s32 %v110, %v112
  %v114 = vrot.slane %v100, %v113
  %v115 = vcombine.low %v107, %v114
  %v116 = vcombine.low %v87, %v88
  %v117 = vcombine.low %v89, %v90
  %v119 = vunpack.c.l.s4 1983009808
  %v120 = vunpack.c.0.s8 %v119
  %v121 = vlaneseq
  %v122 = vshrl.u32 %v121, 7
  %v123 = vsub.s32 %v120, %v122
  %v124 = vrot.slane %v116, %v123
  %v126 = vunpack.c.l.s4 1983009808
  %v127 = vunpack.c.0.s8 %v126
  %v128 = vlaneseq
  %v129 = vshrl.u32 %v128, 7
  %v130 = vsub.s32 %v127, %v129
  %v131 = vrot.slane %v117, %v130
  %v132 = vcombine.low %v124, %v131
  %v135 = vadd.f32 %v28, %v115
  %v136 = vadd.f32 %v29, %v132
  %v139 = vcombine.high %v135, %v135
  %v141 = vunpack.c.l.s4 1983009808
  %v142 = vunpack.c.0.s8 %v141
  %v143 = vlaneseq
  %v144 = vshrl.u32 %v143, 7
  %v145 = vsub.s32 %v142, %v144
  %v146 = vrot.slane %v135, %v145
  %v148 = vunpack.c.l.s4 1983009808
  %v149 = vunpack.c.0.s8 %v148
  %v150 = vlaneseq
  %v151 = vshrl.u32 %v150, 7
  %v152 = vsub.s32 %v149, %v151
  %v153 = vrot.slane %v139, %v152
  %v154 = vcombine.high %v146, %v146
  %v155 = vcombine.high %v153, %v153
  %v156 = vcombine.high %v136, %v136
  %v158 = vunpack.c.l.s4 1983009808
  %v159 = vunpack.c.0.s8 %v158
  %v160 = vlaneseq
  %v161 = vshrl.u32 %v160, 7
  %v162 = vsub.s32 %v159, %v161
  %v163 = vrot.slane %v136, %v162
  %v165 = vunpack.c.l.s4 1983009808
  %v166 = vunpack.c.0.s8 %v165
  %v167 = vlaneseq
  %v168 = vshrl.u32 %v167, 7
  %v169 = vsub.s32 %v166, %v168
  %v170 = vrot.slane %v156, %v169
  %v171 = vcombine.high %v163, %v163
  %v172 = vcombine.high %v170, %v170
  %v181 = vpack.c.bf16 %v146, %v146
  %v182 = vpack.c.bf16 %v154, %v154
  %v183 = vpack.c.bf16 %v153, %v153
  %v184 = vpack.c.bf16 %v155, %v155
  %v185 = vpack.c.bf16 %v163, %v163
  %v186 = vpack.c.bf16 %v171, %v171
  %v187 = vpack.c.bf16 %v170, %v170
  %v188 = vpack.c.bf16 %v172, %v172
  %s189 = smul.u32 0, 1024
  %s190 = sshra.s32 %s189, 3
  %s191 = sand.u32 %s189, 7
  %s192 = smul.addr %s190, 4
  %s193 = scalar_lea.vmem %s3, %s192
  %v194 = vld [vmem:[%s193] sm:$0xf]
  %v195 = vld [vmem:[%s193 + $0x4] sm:$0xf]
  %v196 = vld [vmem:[%s193 + $0x8] sm:$0xf]
  %v197 = vld [vmem:[%s193 + $0xc] sm:$0xf]
  %v198 = vld [vmem:[%s193 + $0x10] sm:$0xf]
  %v199 = vld [vmem:[%s193 + $0x14] sm:$0xf]
  %v200 = vld [vmem:[%s193 + $0x18] sm:$0xf]
  %v201 = vld [vmem:[%s193 + $0x1c] sm:$0xf]
  %v202 = vld [vmem:[%s193 + $0x20] sm:$0xf]
  %v203 = vld [vmem:[%s193 + $0x24] sm:$0xf]
  %v204 = vld [vmem:[%s193 + $0x28] sm:$0xf]
  %v205 = vld [vmem:[%s193 + $0x2c] sm:$0xf]
  %v206 = vld [vmem:[%s193 + $0x30] sm:$0xf]
  %v207 = vld [vmem:[%s193 + $0x34] sm:$0xf]
  %v208 = vld [vmem:[%s193 + $0x38] sm:$0xf]
  %v209 = vld [vmem:[%s193 + $0x3c] sm:$0xf]
  %v210 = vld [vmem:[%s193 + $0x40] sm:$0xf]
  %v211 = vld [vmem:[%s193 + $0x44] sm:$0xf]
  %v212 = vld [vmem:[%s193 + $0x48] sm:$0xf]
  %v213 = vld [vmem:[%s193 + $0x4c] sm:$0xf]
  %v214 = vld [vmem:[%s193 + $0x50] sm:$0xf]
  %v215 = vld [vmem:[%s193 + $0x54] sm:$0xf]
  %v216 = vld [vmem:[%s193 + $0x58] sm:$0xf]
  %v217 = vld [vmem:[%s193 + $0x5c] sm:$0xf]
  %v218 = vld [vmem:[%s193 + $0x60] sm:$0xf]
  %v219 = vld [vmem:[%s193 + $0x64] sm:$0xf]
  %v220 = vld [vmem:[%s193 + $0x68] sm:$0xf]
  %v221 = vld [vmem:[%s193 + $0x6c] sm:$0xf]
  %v222 = vld [vmem:[%s193 + $0x70] sm:$0xf]
  %v223 = vld [vmem:[%s193 + $0x74] sm:$0xf]
  %v224 = vld [vmem:[%s193 + $0x78] sm:$0xf]
  %v225 = vld [vmem:[%s193 + $0x7c] sm:$0xf]
  %v226 = vld [vmem:[%s193 + $0x80] sm:$0xf]
  %v227 = vld [vmem:[%s193 + $0x84] sm:$0xf]
  %v228 = vld [vmem:[%s193 + $0x88] sm:$0xf]
  %v229 = vld [vmem:[%s193 + $0x8c] sm:$0xf]
  %v230 = vld [vmem:[%s193 + $0x90] sm:$0xf]
  %v231 = vld [vmem:[%s193 + $0x94] sm:$0xf]
  %v232 = vld [vmem:[%s193 + $0x98] sm:$0xf]
  %v233 = vld [vmem:[%s193 + $0x9c] sm:$0xf]
  %v234 = vld [vmem:[%s193 + $0xa0] sm:$0xf]
  %v235 = vld [vmem:[%s193 + $0xa4] sm:$0xf]
  %v236 = vld [vmem:[%s193 + $0xa8] sm:$0xf]
  %v237 = vld [vmem:[%s193 + $0xac] sm:$0xf]
  %v238 = vld [vmem:[%s193 + $0xb0] sm:$0xf]
  %v239 = vld [vmem:[%s193 + $0xb4] sm:$0xf]
  %v240 = vld [vmem:[%s193 + $0xb8] sm:$0xf]
  %v241 = vld [vmem:[%s193 + $0xbc] sm:$0xf]
  %v242 = vld [vmem:[%s193 + $0xc0] sm:$0xf]
  %v243 = vld [vmem:[%s193 + $0xc4] sm:$0xf]
  %v244 = vld [vmem:[%s193 + $0xc8] sm:$0xf]
  %v245 = vld [vmem:[%s193 + $0xcc] sm:$0xf]
  %v246 = vld [vmem:[%s193 + $0xd0] sm:$0xf]
  %v247 = vld [vmem:[%s193 + $0xd4] sm:$0xf]
  %v248 = vld [vmem:[%s193 + $0xd8] sm:$0xf]
  %v249 = vld [vmem:[%s193 + $0xdc] sm:$0xf]
  %v250 = vld [vmem:[%s193 + $0xe0] sm:$0xf]
  %v251 = vld [vmem:[%s193 + $0xe4] sm:$0xf]
  %v252 = vld [vmem:[%s193 + $0xe8] sm:$0xf]
  %v253 = vld [vmem:[%s193 + $0xec] sm:$0xf]
  %v254 = vld [vmem:[%s193 + $0xf0] sm:$0xf]
  %v255 = vld [vmem:[%s193 + $0xf4] sm:$0xf]
  %v256 = vld [vmem:[%s193 + $0xf8] sm:$0xf]
  %v257 = vld [vmem:[%s193 + $0xfc] sm:$0xf]
  %v258 = vld [vmem:[%s193 + $0x100] sm:$0xf]
  %v259 = vld [vmem:[%s193 + $0x104] sm:$0xf]
  %v260 = vld [vmem:[%s193 + $0x108] sm:$0xf]
  %v261 = vld [vmem:[%s193 + $0x10c] sm:$0xf]
  %v262 = vld [vmem:[%s193 + $0x110] sm:$0xf]
  %v263 = vld [vmem:[%s193 + $0x114] sm:$0xf]
  %v264 = vld [vmem:[%s193 + $0x118] sm:$0xf]
  %v265 = vld [vmem:[%s193 + $0x11c] sm:$0xf]
  %v266 = vld [vmem:[%s193 + $0x120] sm:$0xf]
  %v267 = vld [vmem:[%s193 + $0x124] sm:$0xf]
  %v268 = vld [vmem:[%s193 + $0x128] sm:$0xf]
  %v269 = vld [vmem:[%s193 + $0x12c] sm:$0xf]
  %v270 = vld [vmem:[%s193 + $0x130] sm:$0xf]
  %v271 = vld [vmem:[%s193 + $0x134] sm:$0xf]
  %v272 = vld [vmem:[%s193 + $0x138] sm:$0xf]
  %v273 = vld [vmem:[%s193 + $0x13c] sm:$0xf]
  %v274 = vld [vmem:[%s193 + $0x140] sm:$0xf]
  %v275 = vld [vmem:[%s193 + $0x144] sm:$0xf]
  %v276 = vld [vmem:[%s193 + $0x148] sm:$0xf]
  %v277 = vld [vmem:[%s193 + $0x14c] sm:$0xf]
  %v278 = vld [vmem:[%s193 + $0x150] sm:$0xf]
  %v279 = vld [vmem:[%s193 + $0x154] sm:$0xf]
  %v280 = vld [vmem:[%s193 + $0x158] sm:$0xf]
  %v281 = vld [vmem:[%s193 + $0x15c] sm:$0xf]
  %v282 = vld [vmem:[%s193 + $0x160] sm:$0xf]
  %v283 = vld [vmem:[%s193 + $0x164] sm:$0xf]
  %v284 = vld [vmem:[%s193 + $0x168] sm:$0xf]
  %v285 = vld [vmem:[%s193 + $0x16c] sm:$0xf]
  %v286 = vld [vmem:[%s193 + $0x170] sm:$0xf]
  %v287 = vld [vmem:[%s193 + $0x174] sm:$0xf]
  %v288 = vld [vmem:[%s193 + $0x178] sm:$0xf]
  %v289 = vld [vmem:[%s193 + $0x17c] sm:$0xf]
  %v290 = vld [vmem:[%s193 + $0x180] sm:$0xf]
  %v291 = vld [vmem:[%s193 + $0x184] sm:$0xf]
  %v292 = vld [vmem:[%s193 + $0x188] sm:$0xf]
  %v293 = vld [vmem:[%s193 + $0x18c] sm:$0xf]
  %v294 = vld [vmem:[%s193 + $0x190] sm:$0xf]
  %v295 = vld [vmem:[%s193 + $0x194] sm:$0xf]
  %v296 = vld [vmem:[%s193 + $0x198] sm:$0xf]
  %v297 = vld [vmem:[%s193 + $0x19c] sm:$0xf]
  %v298 = vld [vmem:[%s193 + $0x1a0] sm:$0xf]
  %v299 = vld [vmem:[%s193 + $0x1a4] sm:$0xf]
  %v300 = vld [vmem:[%s193 + $0x1a8] sm:$0xf]
  %v301 = vld [vmem:[%s193 + $0x1ac] sm:$0xf]
  %v302 = vld [vmem:[%s193 + $0x1b0] sm:$0xf]
  %v303 = vld [vmem:[%s193 + $0x1b4] sm:$0xf]
  %v304 = vld [vmem:[%s193 + $0x1b8] sm:$0xf]
  %v305 = vld [vmem:[%s193 + $0x1bc] sm:$0xf]
  %v306 = vld [vmem:[%s193 + $0x1c0] sm:$0xf]
  %v307 = vld [vmem:[%s193 + $0x1c4] sm:$0xf]
  %v308 = vld [vmem:[%s193 + $0x1c8] sm:$0xf]
  %v309 = vld [vmem:[%s193 + $0x1cc] sm:$0xf]
  %v310 = vld [vmem:[%s193 + $0x1d0] sm:$0xf]
  %v311 = vld [vmem:[%s193 + $0x1d4] sm:$0xf]
  %v312 = vld [vmem:[%s193 + $0x1d8] sm:$0xf]
  %v313 = vld [vmem:[%s193 + $0x1dc] sm:$0xf]
  %v314 = vld [vmem:[%s193 + $0x1e0] sm:$0xf]
  %v315 = vld [vmem:[%s193 + $0x1e4] sm:$0xf]
  %v316 = vld [vmem:[%s193 + $0x1e8] sm:$0xf]
  %v317 = vld [vmem:[%s193 + $0x1ec] sm:$0xf]
  %v318 = vld [vmem:[%s193 + $0x1f0] sm:$0xf]
  %v319 = vld [vmem:[%s193 + $0x1f4] sm:$0xf]
  %v320 = vld [vmem:[%s193 + $0x1f8] sm:$0xf]
  %v321 = vld [vmem:[%s193 + $0x1fc] sm:$0xf]
  %v322 = vld [vmem:[#allocation2] sm:$0x3]
  %v451 = vunpack.c.l.b16 %v194
  %v452 = vunpack.c.l.b16 %v195
  %v453 = vunpack.c.l.b16 %v196
  %v454 = vunpack.c.l.b16 %v197
  %v455 = vunpack.c.l.b16 %v198
  %v456 = vunpack.c.l.b16 %v199
  %v457 = vunpack.c.l.b16 %v200
  %v458 = vunpack.c.l.b16 %v201
  %v459 = vunpack.c.l.b16 %v202
  %v460 = vunpack.c.l.b16 %v203
  %v461 = vunpack.c.l.b16 %v204
  %v462 = vunpack.c.l.b16 %v205
  %v463 = vunpack.c.l.b16 %v206
  %v464 = vunpack.c.l.b16 %v207
  %v465 = vunpack.c.l.b16 %v208
  %v466 = vunpack.c.l.b16 %v209
  %v467 = vunpack.c.l.b16 %v210
  %v468 = vunpack.c.l.b16 %v211
  %v469 = vunpack.c.l.b16 %v212
  %v470 = vunpack.c.l.b16 %v213
  %v471 = vunpack.c.l.b16 %v214
  %v472 = vunpack.c.l.b16 %v215
  %v473 = vunpack.c.l.b16 %v216
  %v474 = vunpack.c.l.b16 %v217
  %v475 = vunpack.c.l.b16 %v218
  %v476 = vunpack.c.l.b16 %v219
  %v477 = vunpack.c.l.b16 %v220
  %v478 = vunpack.c.l.b16 %v221
  %v479 = vunpack.c.l.b16 %v222
  %v480 = vunpack.c.l.b16 %v223
  %v481 = vunpack.c.l.b16 %v224
  %v482 = vunpack.c.l.b16 %v225
  %v483 = vunpack.c.l.b16 %v226
  %v484 = vunpack.c.l.b16 %v227
  %v485 = vunpack.c.l.b16 %v228
  %v486 = vunpack.c.l.b16 %v229
  %v487 = vunpack.c.l.b16 %v230
  %v488 = vunpack.c.l.b16 %v231
  %v489 = vunpack.c.l.b16 %v232
  %v490 = vunpack.c.l.b16 %v233
  %v491 = vunpack.c.l.b16 %v234
  %v492 = vunpack.c.l.b16 %v235
  %v493 = vunpack.c.l.b16 %v236
  %v494 = vunpack.c.l.b16 %v237
  %v495 = vunpack.c.l.b16 %v238
  %v496 = vunpack.c.l.b16 %v239
  %v497 = vunpack.c.l.b16 %v240
  %v498 = vunpack.c.l.b16 %v241
  %v499 = vunpack.c.l.b16 %v242
  %v500 = vunpack.c.l.b16 %v243
  %v501 = vunpack.c.l.b16 %v244
  %v502 = vunpack.c.l.b16 %v245
  %v503 = vunpack.c.l.b16 %v246
  %v504 = vunpack.c.l.b16 %v247
  %v505 = vunpack.c.l.b16 %v248
  %v506 = vunpack.c.l.b16 %v249
  %v507 = vunpack.c.l.b16 %v250
  %v508 = vunpack.c.l.b16 %v251
  %v509 = vunpack.c.l.b16 %v252
  %v510 = vunpack.c.l.b16 %v253
  %v511 = vunpack.c.l.b16 %v254
  %v512 = vunpack.c.l.b16 %v255
  %v513 = vunpack.c.l.b16 %v256
  %v514 = vunpack.c.l.b16 %v257
  %v515 = vunpack.c.l.b16 %v258
  %v516 = vunpack.c.l.b16 %v259
  %v517 = vunpack.c.l.b16 %v260
  %v518 = vunpack.c.l.b16 %v261
  %v519 = vunpack.c.l.b16 %v262
  %v520 = vunpack.c.l.b16 %v263
  %v521 = vunpack.c.l.b16 %v264
  %v522 = vunpack.c.l.b16 %v265
  %v523 = vunpack.c.l.b16 %v266
  %v524 = vunpack.c.l.b16 %v267
  %v525 = vunpack.c.l.b16 %v268
  %v526 = vunpack.c.l.b16 %v269
  %v527 = vunpack.c.l.b16 %v270
  %v528 = vunpack.c.l.b16 %v271
  %v529 = vunpack.c.l.b16 %v272
  %v530 = vunpack.c.l.b16 %v273
  %v531 = vunpack.c.l.b16 %v274
  %v532 = vunpack.c.l.b16 %v275
  %v533 = vunpack.c.l.b16 %v276
  %v534 = vunpack.c.l.b16 %v277
  %v535 = vunpack.c.l.b16 %v278
  %v536 = vunpack.c.l.b16 %v279
  %v537 = vunpack.c.l.b16 %v280
  %v538 = vunpack.c.l.b16 %v281
  %v539 = vunpack.c.l.b16 %v282
  %v540 = vunpack.c.l.b16 %v283
  %v541 = vunpack.c.l.b16 %v284
  %v542 = vunpack.c.l.b16 %v285
  %v543 = vunpack.c.l.b16 %v286
  %v544 = vunpack.c.l.b16 %v287
  %v545 = vunpack.c.l.b16 %v288
  %v546 = vunpack.c.l.b16 %v289
  %v547 = vunpack.c.l.b16 %v290
  %v548 = vunpack.c.l.b16 %v291
  %v549 = vunpack.c.l.b16 %v292
  %v550 = vunpack.c.l.b16 %v293
  %v551 = vunpack.c.l.b16 %v294
  %v552 = vunpack.c.l.b16 %v295
  %v553 = vunpack.c.l.b16 %v296
  %v554 = vunpack.c.l.b16 %v297
  %v555 = vunpack.c.l.b16 %v298
  %v556 = vunpack.c.l.b16 %v299
  %v557 = vunpack.c.l.b16 %v300
  %v558 = vunpack.c.l.b16 %v301
  %v559 = vunpack.c.l.b16 %v302
  %v560 = vunpack.c.l.b16 %v303
  %v561 = vunpack.c.l.b16 %v304
  %v562 = vunpack.c.l.b16 %v305
  %v563 = vunpack.c.l.b16 %v306
  %v564 = vunpack.c.l.b16 %v307
  %v565 = vunpack.c.l.b16 %v308
  %v566 = vunpack.c.l.b16 %v309
  %v567 = vunpack.c.l.b16 %v310
  %v568 = vunpack.c.l.b16 %v311
  %v569 = vunpack.c.l.b16 %v312
  %v570 = vunpack.c.l.b16 %v313
  %v571 = vunpack.c.l.b16 %v314
  %v572 = vunpack.c.l.b16 %v315
  %v573 = vunpack.c.l.b16 %v316
  %v574 = vunpack.c.l.b16 %v317
  %v575 = vunpack.c.l.b16 %v318
  %v576 = vunpack.c.l.b16 %v319
  %v577 = vunpack.c.l.b16 %v320
  %v578 = vunpack.c.l.b16 %v321
  %v579 = vpack.c.b16 %v452, %v451
  %v580 = vpack.c.b16 %v454, %v453
  %v581 = vpack.c.b16 %v456, %v455
  %v582 = vpack.c.b16 %v458, %v457
  %v583 = vpack.c.b16 %v460, %v459
  %v584 = vpack.c.b16 %v462, %v461
  %v585 = vpack.c.b16 %v464, %v463
  %v586 = vpack.c.b16 %v466, %v465
  %v587 = vpack.c.b16 %v468, %v467
  %v588 = vpack.c.b16 %v470, %v469
  %v589 = vpack.c.b16 %v472, %v471
  %v590 = vpack.c.b16 %v474, %v473
  %v591 = vpack.c.b16 %v476, %v475
  %v592 = vpack.c.b16 %v478, %v477
  %v593 = vpack.c.b16 %v480, %v479
  %v594 = vpack.c.b16 %v482, %v481
  %v595 = vpack.c.b16 %v484, %v483
  %v596 = vpack.c.b16 %v486, %v485
  %v597 = vpack.c.b16 %v488, %v487
  %v598 = vpack.c.b16 %v490, %v489
  %v599 = vpack.c.b16 %v492, %v491
  %v600 = vpack.c.b16 %v494, %v493
  %v601 = vpack.c.b16 %v496, %v495
  %v602 = vpack.c.b16 %v498, %v497
  %v603 = vpack.c.b16 %v500, %v499
  %v604 = vpack.c.b16 %v502, %v501
  %v605 = vpack.c.b16 %v504, %v503
  %v606 = vpack.c.b16 %v506, %v505
  %v607 = vpack.c.b16 %v508, %v507
  %v608 = vpack.c.b16 %v510, %v509
  %v609 = vpack.c.b16 %v512, %v511
  %v610 = vpack.c.b16 %v514, %v513
  %v611 = vpack.c.b16 %v516, %v515
  %v612 = vpack.c.b16 %v518, %v517
  %v613 = vpack.c.b16 %v520, %v519
  %v614 = vpack.c.b16 %v522, %v521
  %v615 = vpack.c.b16 %v524, %v523
  %v616 = vpack.c.b16 %v526, %v525
  %v617 = vpack.c.b16 %v528, %v527
  %v618 = vpack.c.b16 %v530, %v529
  %v619 = vpack.c.b16 %v532, %v531
  %v620 = vpack.c.b16 %v534, %v533
  %v621 = vpack.c.b16 %v536, %v535
  %v622 = vpack.c.b16 %v538, %v537
  %v623 = vpack.c.b16 %v540, %v539
  %v624 = vpack.c.b16 %v542, %v541
  %v625 = vpack.c.b16 %v544, %v543
  %v626 = vpack.c.b16 %v546, %v545
  %v627 = vpack.c.b16 %v548, %v547
  %v628 = vpack.c.b16 %v550, %v549
  %v629 = vpack.c.b16 %v552, %v551
  %v630 = vpack.c.b16 %v554, %v553
  %v631 = vpack.c.b16 %v556, %v555
  %v632 = vpack.c.b16 %v558, %v557
  %v633 = vpack.c.b16 %v560, %v559
  %v634 = vpack.c.b16 %v562, %v561
  %v635 = vpack.c.b16 %v564, %v563
  %v636 = vpack.c.b16 %v566, %v565
  %v637 = vpack.c.b16 %v568, %v567
  %v638 = vpack.c.b16 %v570, %v569
  %v639 = vpack.c.b16 %v572, %v571
  %v640 = vpack.c.b16 %v574, %v573
  %v641 = vpack.c.b16 %v576, %v575
  %v642 = vpack.c.b16 %v578, %v577
  %707 = vmatprep.subr.bf16.mxu0 0
  %708 = vmatpush1.bf16.msra.mxu0 %v579
  %709 = vmatprep.subr.bf16.mxu0 0
  %710 = vmatpush1.bf16.msra.mxu0 %v580
  %711 = vmatprep.subr.bf16.mxu0 0
  %712 = vmatpush1.bf16.msra.mxu0 %v581
  %713 = vmatprep.subr.bf16.mxu0 0
  %714 = vmatpush1.bf16.msra.mxu0 %v582
  %715 = vmatprep.subr.bf16.mxu0 0
  %716 = vmatpush1.bf16.msra.mxu0 %v583
  %717 = vmatprep.subr.bf16.mxu0 0
  %718 = vmatpush1.bf16.msra.mxu0 %v584
  %719 = vmatprep.subr.bf16.mxu0 0
  %720 = vmatpush1.bf16.msra.mxu0 %v585
  %721 = vmatprep.subr.bf16.mxu0 0
  %722 = vmatpush1.bf16.msra.mxu0 %v586
  %723 = vmatprep.subr.bf16.mxu0 0
  %724 = vmatpush1.bf16.msra.mxu0 %v587
  %725 = vmatprep.subr.bf16.mxu0 0
  %726 = vmatpush1.bf16.msra.mxu0 %v588
  %727 = vmatprep.subr.bf16.mxu0 0
  %728 = vmatpush1.bf16.msra.mxu0 %v589
  %729 = vmatprep.subr.bf16.mxu0 0
  %730 = vmatpush1.bf16.msra.mxu0 %v590
  %731 = vmatprep.subr.bf16.mxu0 0
  %732 = vmatpush1.bf16.msra.mxu0 %v591
  %733 = vmatprep.subr.bf16.mxu0 0
  %734 = vmatpush1.bf16.msra.mxu0 %v592
  %735 = vmatprep.subr.bf16.mxu0 0
  %736 = vmatpush1.bf16.msra.mxu0 %v593
  %737 = vmatprep.subr.bf16.mxu0 0
  %738 = vmatpush1.bf16.msra.mxu0 %v594
  %739 = vmatprep.mubr.bf16.mxu0 %v182
  %740 = vmatmul.mubr.bf16.gmra.mrb[0].mxu0 %v181
  %v741 = vpop.f32.mrb[0].mxu0
  %v742 = vadd.f32 0.0, %v741
  %v743 = vpop.f32.mrb[0].mxu0
  %v744 = vpop.f32.mrb[0].mxu0
  %v745 = vpop.f32.mrb[0].mxu0
  %746 = vdwg.mxu0
  %747 = vmatprep.subr.bf16.mxu0 0
  %748 = vmatpush1.bf16.msra.mxu0 %v595
  %749 = vmatprep.subr.bf16.mxu0 0
  %750 = vmatpush1.bf16.msra.mxu0 %v596
  %751 = vmatprep.subr.bf16.mxu0 0
  %752 = vmatpush1.bf16.msra.mxu0 %v597
  %753 = vmatprep.subr.bf16.mxu0 0
  %754 = vmatpush1.bf16.msra.mxu0 %v598
  %755 = vmatprep.subr.bf16.mxu0 0
  %756 = vmatpush1.bf16.msra.mxu0 %v599
  %757 = vmatprep.subr.bf16.mxu0 0
  %758 = vmatpush1.bf16.msra.mxu0 %v600
  %759 = vmatprep.subr.bf16.mxu0 0
  %760 = vmatpush1.bf16.msra.mxu0 %v601
  %761 = vmatprep.subr.bf16.mxu0 0
  %762 = vmatpush1.bf16.msra.mxu0 %v602
  %763 = vmatprep.subr.bf16.mxu0 0
  %764 = vmatpush1.bf16.msra.mxu0 %v603
  %765 = vmatprep.subr.bf16.mxu0 0
  %766 = vmatpush1.bf16.msra.mxu0 %v604
  %767 = vmatprep.subr.bf16.mxu0 0
  %768 = vmatpush1.bf16.msra.mxu0 %v605
  %769 = vmatprep.subr.bf16.mxu0 0
  %770 = vmatpush1.bf16.msra.mxu0 %v606
  %771 = vmatprep.subr.bf16.mxu0 0
  %772 = vmatpush1.bf16.msra.mxu0 %v607
  %773 = vmatprep.subr.bf16.mxu0 0
  %774 = vmatpush1.bf16.msra.mxu0 %v608
  %775 = vmatprep.subr.bf16.mxu0 0
  %776 = vmatpush1.bf16.msra.mxu0 %v609
  %777 = vmatprep.subr.bf16.mxu0 0
  %778 = vmatpush1.bf16.msra.mxu0 %v610
  %779 = vmatprep.mubr.bf16.mxu0 %v184
  %780 = vmatmul.mubr.bf16.gmra.mrb[0].mxu0 %v183
  %v781 = vpop.f32.mrb[0].mxu0
  %v782 = vadd.f32 %v742, %v781
  %v783 = vpop.f32.mrb[0].mxu0
  %v784 = vpop.f32.mrb[0].mxu0
  %v785 = vpop.f32.mrb[0].mxu0
  %786 = vdwg.mxu0
  %787 = vmatprep.subr.bf16.mxu0 0
  %788 = vmatpush1.bf16.msra.mxu0 %v611
  %789 = vmatprep.subr.bf16.mxu0 0
  %790 = vmatpush1.bf16.msra.mxu0 %v612
  %791 = vmatprep.subr.bf16.mxu0 0
  %792 = vmatpush1.bf16.msra.mxu0 %v613
  %793 = vmatprep.subr.bf16.mxu0 0
  %794 = vmatpush1.bf16.msra.mxu0 %v614
  %795 = vmatprep.subr.bf16.mxu0 0
  %796 = vmatpush1.bf16.msra.mxu0 %v615
  %797 = vmatprep.subr.bf16.mxu0 0
  %798 = vmatpush1.bf16.msra.mxu0 %v616
  %799 = vmatprep.subr.bf16.mxu0 0
  %800 = vmatpush1.bf16.msra.mxu0 %v617
  %801 = vmatprep.subr.bf16.mxu0 0
  %802 = vmatpush1.bf16.msra.mxu0 %v618
  %803 = vmatprep.subr.bf16.mxu0 0
  %804 = vmatpush1.bf16.msra.mxu0 %v619
  %805 = vmatprep.subr.bf16.mxu0 0
  %806 = vmatpush1.bf16.msra.mxu0 %v620
  %807 = vmatprep.subr.bf16.mxu0 0
  %808 = vmatpush1.bf16.msra.mxu0 %v621
  %809 = vmatprep.subr.bf16.mxu0 0
  %810 = vmatpush1.bf16.msra.mxu0 %v622
  %811 = vmatprep.subr.bf16.mxu0 0
  %812 = vmatpush1.bf16.msra.mxu0 %v623
  %813 = vmatprep.subr.bf16.mxu0 0
  %814 = vmatpush1.bf16.msra.mxu0 %v624
  %815 = vmatprep.subr.bf16.mxu0 0
  %816 = vmatpush1.bf16.msra.mxu0 %v625
  %817 = vmatprep.subr.bf16.mxu0 0
  %818 = vmatpush1.bf16.msra.mxu0 %v626
  %819 = vmatprep.mubr.bf16.mxu0 %v186
  %820 = vmatmul.mubr.bf16.gmra.mrb[0].mxu0 %v185
  %v821 = vpop.f32.mrb[0].mxu0
  %v822 = vadd.f32 %v782, %v821
  %v823 = vpop.f32.mrb[0].mxu0
  %v824 = vpop.f32.mrb[0].mxu0
  %v825 = vpop.f32.mrb[0].mxu0
  %826 = vdwg.mxu0
  %827 = vmatprep.subr.bf16.mxu0 0
  %828 = vmatpush1.bf16.msra.mxu0 %v627
  %829 = vmatprep.subr.bf16.mxu0 0
  %830 = vmatpush1.bf16.msra.mxu0 %v628
  %831 = vmatprep.subr.bf16.mxu0 0
  %832 = vmatpush1.bf16.msra.mxu0 %v629
  %833 = vmatprep.subr.bf16.mxu0 0
  %834 = vmatpush1.bf16.msra.mxu0 %v630
  %835 = vmatprep.subr.bf16.mxu0 0
  %836 = vmatpush1.bf16.msra.mxu0 %v631
  %837 = vmatprep.subr.bf16.mxu0 0
  %838 = vmatpush1.bf16.msra.mxu0 %v632
  %839 = vmatprep.subr.bf16.mxu0 0
  %840 = vmatpush1.bf16.msra.mxu0 %v633
  %841 = vmatprep.subr.bf16.mxu0 0
  %842 = vmatpush1.bf16.msra.mxu0 %v634
  %843 = vmatprep.subr.bf16.mxu0 0
  %844 = vmatpush1.bf16.msra.mxu0 %v635
  %845 = vmatprep.subr.bf16.mxu0 0
  %846 = vmatpush1.bf16.msra.mxu0 %v636
  %847 = vmatprep.subr.bf16.mxu0 0
  %848 = vmatpush1.bf16.msra.mxu0 %v637
  %849 = vmatprep.subr.bf16.mxu0 0
  %850 = vmatpush1.bf16.msra.mxu0 %v638
  %851 = vmatprep.subr.bf16.mxu0 0
  %852 = vmatpush1.bf16.msra.mxu0 %v639
  %853 = vmatprep.subr.bf16.mxu0 0
  %854 = vmatpush1.bf16.msra.mxu0 %v640
  %855 = vmatprep.subr.bf16.mxu0 0
  %856 = vmatpush1.bf16.msra.mxu0 %v641
  %857 = vmatprep.subr.bf16.mxu0 0
  %858 = vmatpush1.bf16.msra.mxu0 %v642
  %859 = vmatprep.mubr.bf16.mxu0 %v188
  %860 = vmatmul.mubr.bf16.gmra.mrb[0].mxu0 %v187
  %v861 = vpop.f32.mrb[0].mxu0
  %v862 = vadd.f32 %v822, %v861
  %v863 = vpop.f32.mrb[0].mxu0
  %v864 = vpop.f32.mrb[0].mxu0
  %v865 = vpop.f32.mrb[0].mxu0
  %866 = vdwg.mxu0
  %v867 = vadd.f32 %v322, %v862
  %vm868 = vcmask 254976
  %869 = vst.msk [vmem:[#allocation2] sm:$0x3] %vm868, %v867
  // Predicated region
  $region26: #{get_penalty.1} parent=0 // pred_check
    %p870 = pneg %p21
  $region27: #{get_penalty.1} parent=0 // pred_check_branch
    %872 = sbr.rel (%p870) target = $region29
  $region28: #{get_penalty.1} parent=0 // pred_region
    %v873 = vld [vmem:[#allocation2] sm:$0x3]
    %v874 = vtanh.pop %v873
    %v875 = vmul.f32 %v874, %v874
    %v876 = vsub.f32 1.0, %v875
    %v877 = vld [vmem:[%s4] sm:$0xff]
    %v878 = vld [vmem:[%s4 + $0x8] sm:$0xff]
    %v879 = vld [vmem:[%s4 + $0x10] sm:$0xff]
    %v880 = vld [vmem:[%s4 + $0x18] sm:$0xff]
    %vm881 = vcmask 261120
    %v883 = vsel %vm881, %v876, 0
    %885 = vmatprep.subr.mxu0 0.0
    %886 = vmatpush1.msra.mxu0 %v877
    %887 = vmatprep.subr.mxu0 0.0
    %888 = vmatpush1.msra.mxu0 %v878
    %889 = vmatprep.subr.mxu0 0.0
    %890 = vmatpush1.msra.mxu0 %v879
    %891 = vmatprep.subr.mxu0 0.0
    %892 = vmatpush1.msra.mxu0 %v880
    %893 = vmatprep.subr.mxu0 0.0
    %894 = vmatpush1.msra.mxu0 0.0
    %895 = vmatprep.subr.mxu0 0.0
    %896 = vmatpush1.msra.mxu0 0.0
    %897 = vmatprep.subr.mxu0 0.0
    %898 = vmatpush1.msra.mxu0 0.0
    %899 = vmatprep.subr.mxu0 0.0
    %900 = vmatpush1.msra.mxu0 0.0
    %901 = vmatprep.subr.mxu0 0.0
    %902 = vmatpush1.msra.mxu0 0.0
    %903 = vmatprep.subr.mxu0 0.0
    %904 = vmatpush1.msra.mxu0 0.0
    %905 = vmatprep.subr.mxu0 0.0
    %906 = vmatpush1.msra.mxu0 0.0
    %907 = vmatprep.subr.mxu0 0.0
    %908 = vmatpush1.msra.mxu0 0.0
    %909 = vmatprep.subr.mxu0 0.0
    %910 = vmatpush1.msra.mxu0 0.0
    %911 = vmatprep.subr.mxu0 0.0
    %912 = vmatpush1.msra.mxu0 0.0
    %913 = vmatprep.subr.mxu0 0.0
    %914 = vmatpush1.msra.mxu0 0.0
    %915 = vmatprep.subr.mxu0 0.0
    %916 = vmatpush1.msra.mxu0 0.0
    %917 = vmatprep.subr.mxu0 0.0
    %918 = vmatpush1.msra.mxu0 0.0
    %919 = vmatprep.subr.mxu0 0.0
    %920 = vmatpush1.msra.mxu0 0.0
    %921 = vmatprep.subr.mxu0 0.0
    %922 = vmatpush1.msra.mxu0 0.0
    %923 = vmatprep.subr.mxu0 0.0
    %924 = vmatpush1.msra.mxu0 0.0
    %925 = vmatprep.subr.mxu0 0.0
    %926 = vmatpush1.msra.mxu0 0.0
    %927 = vmatprep.subr.mxu0 0.0
    %928 = vmatpush1.msra.mxu0 0.0
    %929 = vmatprep.subr.mxu0 0.0
    %930 = vmatpush1.msra.mxu0 0.0
    %931 = vmatprep.subr.mxu0 0.0
    %932 = vmatpush1.msra.mxu0 0.0
    %933 = vmatprep.subr.mxu0 0.0
    %934 = vmatpush1.msra.mxu0 0.0
    %935 = vmatprep.subr.mxu0 0.0
    %936 = vmatpush1.msra.mxu0 0.0
    %937 = vmatprep.subr.mxu0 0.0
    %938 = vmatpush1.msra.mxu0 0.0
    %939 = vmatprep.subr.mxu0 0.0
    %940 = vmatpush1.msra.mxu0 0.0
    %941 = vmatprep.subr.mxu0 0.0
    %942 = vmatpush1.msra.mxu0 0.0
    %943 = vmatprep.subr.mxu0 0.0
    %944 = vmatpush1.msra.mxu0 0.0
    %945 = vmatprep.subr.mxu0 0.0
    %946 = vmatpush1.msra.mxu0 0.0
    %947 = vmatprep.subr.mxu0 0.0
    %948 = vmatpush1.msra.mxu0 0.0
    %949 = vmatprep.mubr.f32.mxu0 0.0
    %950 = vmatmul.mubr.f32.gmra.mrb[0].mxu0 %v883
    %v951 = vpop.f32.mrb[0].mxu0
    %v952 = vadd.f32 0.0, %v951
    %v953 = vpop.f32.mrb[0].mxu0
    %954 = vdwg.mxu0
    %v955 = vmul.f32 %v952, %v876
    %v956 = vsel %vm868, %v955, 0.0
    %957 = vadd.xlane.f32.xlu0 %v956
    %v958 = vpop.xlane.xlu0 %957
    %v959 = vmax.f32 %v958, 0.0
    %v960 = vrsqrt.pop %v959
    %v961 = vmul.f32 %v959, %v960
    %vm962 = vcmp.eq.f32.partialorder %v959, inf
    %v963 = vsel %vm962, %v959, %v961
    %vm964 = vcmp.eq.f32.partialorder %v959, 0.0
    %v965 = vand.u32 %v959, 2147483648
    %v966 = vsel %vm964, %v965, %v963
    %v967 = vsub.f32 %v966, 1.0
    %v968 = vmul.f32 %v967, %v967
    %vm969 = vcmask 1024
    %970 = vst.msk [vmem:[%s5] sm:$0x3] %vm969, %v968
  $region29: #{get_penalty.1} parent=0 // pred_fallthru
    _
  // Predicated region
  $region30: #{get_penalty.1} parent=0 // pred_check
    _
  $region31: #{get_penalty.1} parent=0 // pred_check_branch
    %972 = sbr.rel (0) target = $region33
  $region32: #{get_penalty.1} parent=0 // pred_region
    _
  $region33: #{get_penalty.1} parent=0 // pred_fallthru
    _
  // Predicated region
  $region34: #{get_penalty.1} parent=0 // pred_check
    _
  $region35: #{get_penalty.1} parent=0 // pred_check_branch
    %974 = sbr.rel (0) target = $region37
  $region36: #{get_penalty.1} parent=0 // pred_region
    _
  $region37: #{get_penalty.1} parent=0 // pred_fallthru
    _

</llo_original>
